<compile_context>
chip_gen: v7x
topology: tpu7x:2x2x1
jax: 0.10.0
libtpu: 0.0.40
codegen_flags: <defaults>
</compile_context>

<pallas_src>
import jax
import jax.numpy as jnp
from jax.experimental import pallas as pl
from jax.experimental.pallas import tpu as pltpu


LANES = 128                      # vreg lane width (minimum lane-dense width)
WIDTHS = (1024, 512, 256, 128)   # candidate lane-dense widths (multiples of 128)
TILE_BYTES = 1 << 20             # ~1 MiB per streamed tile (x + out, 2x-buffered ~4 MiB)
MIN_KERNEL_ELEMS = 1 << 16       # below this, XLA elementwise beats pallas_call dispatch


def _round_up(a: int, m: int) -> int:
    return ((a + m - 1) // m) * m


def linear_kernel(w_ref, b_ref, x_ref, o_ref):
    # w_ref, b_ref: (1, 1) f32 scalars in SMEM (scalar path, no MXU).
    # x_ref / o_ref: (tile_r, width) tiles in VMEM in the array's native dtype.
    # Upcast to f32 on the VPU, compute the affine, cast back before the store.
    w = w_ref[0, 0]
    b = b_ref[0, 0]
    y = x_ref[...].astype(jnp.float32) * w + b
    o_ref[...] = y.astype(o_ref.dtype)


def linear_regression_forward(x, w, b, *, force_kernel=False):
    """x: (N, 1), w: (1, 1), b: (1,)  ->  (N, 1).  Matches nn.Linear(1, 1)."""
    n = x.shape[0]
    dtype = x.dtype
    w_s = w.reshape(()).astype(jnp.float32)
    b_s = b.reshape(()).astype(jnp.float32)

    if n == 0:
        return jnp.zeros((0, 1), dtype)

    if n < MIN_KERNEL_ELEMS and not force_kernel:
        # Tiny problem: pallas_call dispatch overhead >> 2*N FLOPs.  Plain JAX.
        return (x.astype(jnp.float32) * w_s + b_s).astype(dtype)

    itemsize = jnp.dtype(dtype).itemsize
    # Sublane packing alignment for block rows: f32 -> 8, bf16 -> 16, int8 -> 32.
    row_align = 8 * max(1, 4 // itemsize)

    # Lane-dense view.  Prefer a width that divides N so the reshape is a pure
    # bitcast (zero extra HBM traffic); otherwise fall back to width=128 and
    # pad only the <=127-element lane tail.
    width = next((wd for wd in WIDTHS if n % wd == 0), LANES)
    rows = pl.cdiv(n, width)
    n_view = rows * width

    if n_view == n:
        x2d = x.reshape(rows, width)        # free contiguous view, native dtype
        padded = False
    else:
        # TODO(synk): lane-tail padding costs one extra HBM pass; only hit when
        # N is not a multiple of 128 (Pallas can't express a ragged lane dim).
        x2d = jnp.pad(x.reshape(-1), (0, n_view - n)).reshape(rows, width)
        padded = True

    # Row tiling: ~1 MiB tiles, block rows aligned to the sublane packing.
    # grid = cdiv(rows, tile_r); Pallas masks the partial last block, so no
    # round-up padding of rows is needed.
    if rows <= row_align:
        tile_r = rows                       # block row-dim equals full array dim
    else:
        tile_r_max = max(
            row_align,
            (TILE_BYTES // (width * itemsize)) // row_align * row_align)
        tile_r = min(tile_r_max, _round_up(rows, row_align))

    out2d = pl.pallas_call(
        linear_kernel,
        out_shape=jax.ShapeDtypeStruct((rows, width), dtype),
        grid_spec=pl.GridSpec(
            grid=(pl.cdiv(rows, tile_r),),
            in_specs=[
                pl.BlockSpec(memory_space=pltpu.SMEM),             # w (1, 1)
                pl.BlockSpec(memory_space=pltpu.SMEM),             # b (1, 1)
                pl.BlockSpec((tile_r, width), lambda i: (i, 0)),   # x tile
            ],
            out_specs=pl.BlockSpec((tile_r, width), lambda i: (i, 0)),
        ),
        compiler_params=pltpu.CompilerParams(
            dimension_semantics=("parallel",),       # shards tiles across TCs on v7x
            vmem_limit_bytes=32 * 1024 * 1024,
        ),
    )(w_s.reshape(1, 1), b_s.reshape(1, 1), x2d)

    if padded:
        return out2d.reshape(-1)[:n].reshape(n, 1)
    return out2d.reshape(n, 1)              # free contiguous view


if __name__ == "__main__":
    key = jax.random.PRNGKey(0)
    kx, kw, kb, kx2, kx3 = jax.random.split(key, 5)

    # nn.Linear(1, 1) init: U(-1/sqrt(fan_in), 1/sqrt(fan_in)) = U(-1, 1).
    w = jax.random.uniform(kw, (1, 1), jnp.float32, minval=-1.0, maxval=1.0)
    b = jax.random.uniform(kb, (1,), jnp.float32, minval=-1.0, maxval=1.0)

    def ref(x):
        return x @ w.T + b

    # 1) Module-scale small batch — small-N fast path.
    x_small = jax.random.normal(kx, (8, 1), jnp.float32)
    out_small = jax.block_until_ready(linear_regression_forward(x_small, w, b))
    assert out_small.shape == (8, 1)
    assert jnp.allclose(out_small, ref(x_small), atol=1e-6), "small-path mismatch"

    # 2) Same small batch forced through the Pallas kernel (lane-tail pad path).
    out_small_k = jax.block_until_ready(
        linear_regression_forward(x_small, w, b, force_kernel=True))
    assert out_small_k.shape == (8, 1)
    assert jnp.allclose(out_small_k, ref(x_small), atol=1e-6), "kernel mismatch (small)"

    # 3) N a multiple of 1024 — zero-copy lane-dense view, no pad / no slice.
    x_mid = jax.random.normal(kx2, (4096, 1), jnp.float32)
    out_mid = jax.block_until_ready(
        linear_regression_forward(x_mid, w, b, force_kernel=True))
    assert out_mid.shape == (4096, 1)
    assert jnp.allclose(out_mid, ref(x_mid), atol=1e-5), "kernel mismatch (aligned)"

    # 4) Ragged N above the threshold — default path, tiled kernel + masked tail.
    n_big = 70_003
    x_big = jax.random.normal(kx3, (n_big, 1), jnp.float32)
    out_big = jax.block_until_ready(linear_regression_forward(x_big, w, b))
    assert out_big.shape == (n_big, 1)
    assert jnp.allclose(out_big, ref(x_big), atol=1e-5), "kernel mismatch (large)"

    print("KERNEL_OK")
</pallas_src>

<mosaic_0001>
module attributes {stable_mosaic.version = 11 : i64} {
  func.func @linear_kernel(%arg0: i32, %arg1: memref<1x1xf32, #tpu.memory_space<smem>>, %arg2: memref<1x1xf32, #tpu.memory_space<smem>>, %arg3: memref<1x128xf32, #tpu.memory_space<vmem>>, %arg4: memref<1x128xf32, #tpu.memory_space<vmem>>) attributes {dimension_semantics = [#tpu.dimension_semantics<parallel>], iteration_bounds = array<i64: 1>, scalar_prefetch = 0 : i64, scratch_operands = 0 : i64, tpu.core_type = #tpu.core_type<tc>, window_params = [{transform_indices = @transform_0, window_bounds = array<i64: 1, 1>}, {transform_indices = @transform_1, window_bounds = array<i64: 1, 1>}, {transform_indices = @transform_2, window_bounds = array<i64: 1, 128>}, {transform_indices = @transform_3, window_bounds = array<i64: 1, 128>}]} {
    %c0 = arith.constant 0 : index
    %c0_0 = arith.constant 0 : index
    %0 = memref.load %arg1[%c0, %c0_0] : memref<1x1xf32, #tpu.memory_space<smem>>
    %c0_1 = arith.constant 0 : index
    %c0_2 = arith.constant 0 : index
    %1 = memref.load %arg2[%c0_1, %c0_2] : memref<1x1xf32, #tpu.memory_space<smem>>
    %c0_3 = arith.constant 0 : index
    %c0_4 = arith.constant 0 : index
    %2 = vector.load %arg3[%c0_3, %c0_4] : memref<1x128xf32, #tpu.memory_space<vmem>>, vector<1x128xf32>
    %3 = vector.broadcast %0 : f32 to vector<1x128xf32>
    %4 = arith.mulf %2, %3 : vector<1x128xf32>
    %5 = vector.broadcast %1 : f32 to vector<1x128xf32>
    %6 = arith.addf %4, %5 : vector<1x128xf32>
    %c0_5 = arith.constant 0 : index
    %c0_6 = arith.constant 0 : index
    %7 = vector.load %arg4[%c0_5, %c0_6] : memref<1x128xf32, #tpu.memory_space<vmem>>, vector<1x128xf32>
    tpu.vector_store %arg4[%c0_5, %c0_6], %6 {strides = array<i32>} : memref<1x128xf32, #tpu.memory_space<vmem>>, vector<1x128xf32>,
    return
  }
  func.func @transform_0(%arg0: i32) -> (i32, i32) {
    %c0_i32 = arith.constant 0 : i32
    %c0_i32_0 = arith.constant 0 : i32
    %c0_i32_1 = arith.constant 0 : i32
    return %c0_i32, %c0_i32_0 : i32, i32
  }
  func.func @transform_1(%arg0: i32) -> (i32, i32) {
    %c0_i32 = arith.constant 0 : i32
    %c0_i32_0 = arith.constant 0 : i32
    %c0_i32_1 = arith.constant 0 : i32
    return %c0_i32, %c0_i32_0 : i32, i32
  }
  func.func @transform_2(%arg0: i32) -> (i32, i32) {
    %c0_i32 = arith.constant 0 : i32
    %c0_i32_0 = arith.constant 0 : i32
    return %arg0, %c0_i32 : i32, i32
  }
  func.func @transform_3(%arg0: i32) -> (i32, i32) {
    %c0_i32 = arith.constant 0 : i32
    %c0_i32_0 = arith.constant 0 : i32
    return %arg0, %c0_i32 : i32, i32
  }
}

</mosaic_0001>

<llo_original>
// kernel: tpu_custom_call.1
$region0: #{tpu_custom_call.1}
  #allocation0 [shape = 'u32[]', space=smem, size = 0x4, offset = 0x4, fixed_abs, tag = 'smem constant byte address 0x4 - core index']
  #allocation1 [shape = 'u32[144,128]{1,0:T(1,128)}', space=vmem, size = 0x12000, scoped, tag = 'internal scratch']
  #allocation2 [shape = 'f32[1,1]{1,0:T(1,128)S(6)}', space=smem, size = 0x200, scoped, tag = 'scoped memory for tpu_custom_call.1']
  #allocation3 [shape = 'f32[1,1]{1,0:T(1,128)S(6)}', space=smem, size = 0x200, scoped, tag = 'scoped memory for tpu_custom_call.1']
  %s0 = inlined_call_operand.<no memory space> [shape: f32[1,1], index: 0, kind: input, shape index: {}]
  %s1 = inlined_call_operand.<no memory space> [shape: f32[1,1], index: 1, kind: input, shape index: {}]
  %s2 = inlined_call_operand.vmem [shape: f32[1,128], index: 2, kind: input, shape index: {}]
  %s3 = inlined_call_operand.hbm [shape: f32[1,128], index: 3, kind: output, shape index: {}]
  %s4 = sld [smem:[#allocation0]]
  $region22: #{tpu_custom_call.1} parent=0
    _
  %s6 = ssub.s32 1, %s4
  %s7 = scalar_select 0, %s6, %s4
  %8 = sst [smem:[#allocation2]] %s0
  %9 = sst [smem:[#allocation3]] %s1
  $region1: #{tpu_custom_call.1} parent=0
    #allocation4 [shape = 'u8[512]{0}', space=vmem, size = 0x400, scoped, tag = 'output window, operand 0, single buffered']
    #allocation5 [shape = 's32[1]{0}', space=sflag, size = 0x4, scoped, tag = 'scoped memory for tpu_custom_call.1']
    %10 = vsyncpa [#allocation5], 0
    // Predicated region
    $region2: #{tpu_custom_call.1} parent=1 // pred_check
      _
    $region3: #{tpu_custom_call.1} parent=1 // pred_check_branch
      %12 = sbr.rel (0) target = $region5
    $region4: #{tpu_custom_call.1} parent=1 // pred_region
      _
    $region5: #{tpu_custom_call.1} parent=1 // pred_fallthru
      _
    // Predicated region
    $region6: #{tpu_custom_call.1} parent=1 // pred_check
      _
    $region7: #{tpu_custom_call.1} parent=1 // pred_check_branch
      %14 = sbr.rel (0) target = $region9
    $region8: #{tpu_custom_call.1} parent=1 // pred_region
      _
    $region9: #{tpu_custom_call.1} parent=1 // pred_fallthru
      _
    // Predicated region
    $region10: #{tpu_custom_call.1} parent=1 // pred_check
      _
    $region11: #{tpu_custom_call.1} parent=1 // pred_check_branch
      %16 = sbr.rel (0) target = $region13
    $region12: #{tpu_custom_call.1} parent=1 // pred_region
      _
    $region13: #{tpu_custom_call.1} parent=1 // pred_fallthru
      _
    %s17 = sld [smem:[#allocation2]]
    %s18 = sld [smem:[#allocation3]]
    %v19 = vld [vmem:[%s2] sm:$0x1]
    %v20 = vstv %s17
    %v21 = vmul.f32 %v19, %v20
    %v22 = vstv %s18
    %v23 = vadd.f32 %v21, %v22
    %24 = vst [vmem:[#allocation4] sm:$0x1] %v23
    // Predicated region
    $region14: #{tpu_custom_call.1} parent=1 // pred_check
      _
    $region15: #{tpu_custom_call.1} parent=1 // pred_check_branch
      %26 = sbr.rel (0) target = $region17
    $region16: #{tpu_custom_call.1} parent=1 // pred_region
      %s28 = ssub.s32 16, 16
      %29 = vsyncadd [#allocation5], %s28
      %s31 = sshll.u32 [#allocation4], 4
      %s32 = int_to_ptr.vmem [resolvable:$true] %s31
      %34 = dma.vmem_to_hbm [thread:$0]  %s32, 16, %s3, [#allocation5]
    $region17: #{tpu_custom_call.1} parent=1 // pred_fallthru
      _
    // Predicated region
    $region18: #{tpu_custom_call.1} parent=1 // pred_check
      _
    $region19: #{tpu_custom_call.1} parent=1 // pred_check_branch
      %36 = sbr.rel (0) target = $region21
    $region20: #{tpu_custom_call.1} parent=1 // pred_region
      %37 = dma.done [#allocation5], 16
    $region21: #{tpu_custom_call.1} parent=1 // pred_fallthru
      _
    %38 = vsyncpa [#allocation5], 1

</llo_original>
